<compile_context>
chip_gen: v7x
topology: tpu7x:2x2x1
jax: 0.10.0
libtpu: 0.0.40
codegen_flags: <defaults>
</compile_context>

<pallas_src>
import functools
import math

import jax
import jax.numpy as jnp
from jax.experimental import pallas as pl
from jax.experimental.pallas import tpu as pltpu


def _compromise_loss_kernel(x_ref, t_ref, out_ref, acc_ref, *,
                            k, exp_k, tm, n_total, scale):
    i = pl.program_id(0)

    x = x_ref[...]                                   # (TM, C) f32
    t = t_ref[...]                                   # (TM, 1) i32

    kf = jnp.float32(k)
    ekf = jnp.float32(exp_k)                         # exp(k) precomputed on host

    # slower_exp(x) elementwise (VPU compare/select + one EUP exp per element)
    se = jnp.where(x >= kf, ekf * (x - kf + 1.0), jnp.exp(x))
    denom = jnp.sum(se, axis=1, keepdims=True)       # (TM, 1)  row sum (XLU)

    # Pick the target logit via one-hot compare+select + row reduce (no MXU,
    # no dynamic gather).
    col = jax.lax.broadcasted_iota(jnp.int32, x.shape, 1)        # (TM, C)
    onehot = (col == t).astype(jnp.float32)                      # (TM, C)
    x_t = jnp.sum(x * onehot, axis=1, keepdims=True)             # (TM, 1)

    # log(slower_exp(x_t)) computed directly from x_t: only O(rows) logs.
    picked_log = jnp.where(x_t >= kf, kf + jnp.log(x_t - kf + 1.0), x_t)

    # NLL per row: -log(se_t / denom) = log(denom) - log(se_t)
    row_loss = jnp.log(denom) - picked_log                       # (TM, 1)

    # Mask rows past the true batch size (padded last tile).
    row_ids = jax.lax.broadcasted_iota(jnp.int32, (tm, 1), 0) + i * tm
    row_loss = jnp.where(row_ids < n_total, row_loss, 0.0)

    @pl.when(i == 0)
    def _():
        acc_ref[...] = jnp.zeros_like(acc_ref)

    acc_ref[...] = acc_ref[...] + jnp.sum(row_loss, axis=0, keepdims=True)

    @pl.when(i == pl.num_programs(0) - 1)
    def _():
        out_ref[...] = acc_ref[...] * jnp.float32(scale)


def compromise_loss(x, target, k=3.0, size_average=True, tm=256):
    """x: (N, C) float32 logits; target: (N,) int class indices."""
    n, c = x.shape
    t2d = target.astype(jnp.int32).reshape(n, 1)

    # Tile over the batch axis only; class axis (lanes) stays whole.
    if n <= tm:
        tm = n                      # single tile == full array dims (always legal)
    else:
        tm = max(8, (tm // 8) * 8)  # second-to-last block dim must be /8
    num_tiles = pl.cdiv(n, tm)

    scale = (1.0 / float(n)) if size_average else 1.0

    kernel = functools.partial(
        _compromise_loss_kernel,
        k=float(k),
        exp_k=math.exp(float(k)),
        tm=tm,
        n_total=n,
        scale=scale,
    )

    out = pl.pallas_call(
        kernel,
        out_shape=jax.ShapeDtypeStruct((1, 1), jnp.float32),
        grid=(num_tiles,),
        in_specs=[
            pl.BlockSpec((tm, c), lambda i: (i, 0)),
            pl.BlockSpec((tm, 1), lambda i: (i, 0)),
        ],
        out_specs=pl.BlockSpec((1, 1), lambda i: (0, 0)),
        scratch_shapes=[pltpu.VMEM((1, 1), jnp.float32)],
        compiler_params=pltpu.CompilerParams(
            dimension_semantics=("arbitrary",),
        ),
    )(x, t2d)
    # TODO(synk): for v7x megacore, emit per-tile partial sums instead of a
    # shared accumulator so the grid axis can be 'parallel' across 2 TCs.
    return out[0, 0]


def _reference(x, target, k=3.0, size_average=True):
    kf = jnp.float32(k)
    se = jnp.where(x >= kf, jnp.exp(kf) * (x - kf + 1.0), jnp.exp(x))
    logp = jnp.log(se / jnp.sum(se, axis=1, keepdims=True))
    picked = jnp.take_along_axis(logp, target[:, None].astype(jnp.int32), axis=1)[:, 0]
    loss = -jnp.sum(picked)
    if size_average:
        loss = loss / x.shape[0]
    return loss


if __name__ == "__main__":
    key = jax.random.PRNGKey(0)
    kx, kt, kx2, kt2 = jax.random.split(key, 4)

    # Small case matching the module (logits over C classes).
    N, C = 8, 32
    x = jax.random.normal(kx, (N, C), dtype=jnp.float32) * 3.0  # values cross k=3
    target = jax.random.randint(kt, (N,), 0, C, dtype=jnp.int32)

    loss_mean = jax.block_until_ready(compromise_loss(x, target, k=3.0, size_average=True))
    ref_mean = jax.block_until_ready(_reference(x, target, k=3.0, size_average=True))
    assert jnp.allclose(loss_mean, ref_mean, rtol=1e-5, atol=1e-5), (loss_mean, ref_mean)

    loss_sum = jax.block_until_ready(compromise_loss(x, target, k=3.0, size_average=False))
    ref_sum = jax.block_until_ready(_reference(x, target, k=3.0, size_average=False))
    assert jnp.allclose(loss_sum, ref_sum, rtol=1e-5, atol=1e-5), (loss_sum, ref_sum)

    # Multi-tile case with a padded (non-divisible) last tile to exercise the
    # grid / accumulator / masking path.
    N2, C2 = 20, 128
    x2 = jax.random.normal(kx2, (N2, C2), dtype=jnp.float32) * 3.0
    t2 = jax.random.randint(kt2, (N2,), 0, C2, dtype=jnp.int32)

    loss2 = jax.block_until_ready(compromise_loss(x2, t2, k=3.0, size_average=True, tm=8))
    ref2 = jax.block_until_ready(_reference(x2, t2, k=3.0, size_average=True))
    assert jnp.allclose(loss2, ref2, rtol=1e-5, atol=1e-5), (loss2, ref2)

    print("KERNEL_OK")
</pallas_src>

<mosaic_0001>
module attributes {stable_mosaic.version = 11 : i64} {
  func.func @_compromise_loss_kernel(%arg0: i32, %arg1: memref<8x32xf32, #tpu.memory_space<vmem>>, %arg2: memref<8x1xi32, #tpu.memory_space<vmem>>, %arg3: memref<1x1xf32, #tpu.memory_space<vmem>>, %arg4: memref<1x1xf32, #tpu.memory_space<vmem>>) attributes {dimension_semantics = [#tpu.dimension_semantics<arbitrary>], iteration_bounds = array<i64: 1>, scalar_prefetch = 0 : i64, scratch_operands = 1 : i64, tpu.core_type = #tpu.core_type<tc>, window_params = [{transform_indices = @transform_0, window_bounds = array<i64: 8, 32>}, {transform_indices = @transform_1, window_bounds = array<i64: 8, 1>}, {pipeline_mode = #tpu.pipeline_mode<synchronous>, transform_indices = @transform_2, window_bounds = array<i64: 1, 1>}]} {
    %c0 = arith.constant 0 : index
    %c0_0 = arith.constant 0 : index
    %0 = vector.load %arg1[%c0, %c0_0] : memref<8x32xf32, #tpu.memory_space<vmem>>, vector<8x32xf32>
    %c0_1 = arith.constant 0 : index
    %c0_2 = arith.constant 0 : index
    %1 = vector.load %arg2[%c0_1, %c0_2] : memref<8x1xi32, #tpu.memory_space<vmem>>, vector<8x1xi32>
    %cst = arith.constant 3.000000e+00 : f32
    %2 = vector.broadcast %cst : f32 to vector<8x32xf32>
    %3 = arith.cmpf oge, %0, %2 : vector<8x32xf32>
    %cst_3 = arith.constant 3.000000e+00 : f32
    %4 = vector.broadcast %cst_3 : f32 to vector<8x32xf32>
    %5 = arith.subf %0, %4 : vector<8x32xf32>
    %cst_4 = arith.constant 1.000000e+00 : f32
    %6 = vector.broadcast %cst_4 : f32 to vector<8x32xf32>
    %7 = arith.addf %5, %6 : vector<8x32xf32>
    %cst_5 = arith.constant 20.085537 : f32
    %8 = vector.broadcast %cst_5 : f32 to vector<8x32xf32>
    %9 = arith.mulf %8, %7 : vector<8x32xf32>
    %10 = math.exp %0 : vector<8x32xf32>
    %11 = arith.select %3, %9, %10 : vector<8x32xi1>, vector<8x32xf32>
    %cst_6 = arith.constant dense<0.000000e+00> : vector<8xf32>
    %12 = vector.multi_reduction <add>, %11, %cst_6 [1] : vector<8x32xf32> to vector<8xf32>
    %13 = vector.shape_cast %12 : vector<8xf32> to vector<8x1xf32>
    %14 = tpu.iota {dimensions = array<i32: 1>} : vector<8x32xi32>
    %15 = vector.broadcast %1 : vector<8x1xi32> to vector<8x32xi32>
    %16 = arith.cmpi eq, %14, %15 : vector<8x32xi32>
    %17 = arith.extui %16 : vector<8x32xi1> to vector<8x32xi32>
    %18 = arith.sitofp %17 : vector<8x32xi32> to vector<8x32xf32>
    %19 = arith.mulf %0, %18 : vector<8x32xf32>
    %cst_7 = arith.constant dense<0.000000e+00> : vector<8xf32>
    %20 = vector.multi_reduction <add>, %19, %cst_7 [1] : vector<8x32xf32> to vector<8xf32>
    %21 = vector.shape_cast %20 : vector<8xf32> to vector<8x1xf32>
    %cst_8 = arith.constant 3.000000e+00 : f32
    %22 = vector.broadcast %cst_8 : f32 to vector<8x1xf32>
    %23 = arith.cmpf oge, %21, %22 : vector<8x1xf32>
    %cst_9 = arith.constant 3.000000e+00 : f32
    %24 = vector.broadcast %cst_9 : f32 to vector<8x1xf32>
    %25 = arith.subf %21, %24 : vector<8x1xf32>
    %cst_10 = arith.constant 1.000000e+00 : f32
    %26 = vector.broadcast %cst_10 : f32 to vector<8x1xf32>
    %27 = arith.addf %25, %26 : vector<8x1xf32>
    %28 = math.log %27 : vector<8x1xf32>
    %cst_11 = arith.constant 3.000000e+00 : f32
    %29 = vector.broadcast %cst_11 : f32 to vector<8x1xf32>
    %30 = arith.addf %29, %28 : vector<8x1xf32>
    %31 = arith.select %23, %30, %21 : vector<8x1xi1>, vector<8x1xf32>
    %32 = math.log %13 : vector<8x1xf32>
    %33 = arith.subf %32, %31 : vector<8x1xf32>
    %34 = tpu.iota {dimensions = array<i32: 0>} : vector<8x1xi32>
    %c8_i32 = arith.constant 8 : i32
    %35 = arith.muli %arg0, %c8_i32 : i32
    %36 = vector.broadcast %35 : i32 to vector<8x1xi32>
    %37 = arith.addi %34, %36 : vector<8x1xi32>
    %c8_i32_12 = arith.constant 8 : i32
    %38 = vector.broadcast %c8_i32_12 : i32 to vector<8x1xi32>
    %39 = arith.cmpi slt, %37, %38 : vector<8x1xi32>
    %cst_13 = arith.constant 0.000000e+00 : f32
    %40 = vector.broadcast %cst_13 : f32 to vector<8x1xf32>
    %41 = arith.select %39, %33, %40 : vector<8x1xi1>, vector<8x1xf32>
    %c0_i32 = arith.constant 0 : i32
    %42 = arith.cmpi eq, %arg0, %c0_i32 : i32
    %43 = arith.extui %42 : i1 to i32
    %c0_i32_14 = arith.constant 0 : i32
    %44 = arith.cmpi ne, %43, %c0_i32_14 : i32
    scf.if %44 {
      %cst_22 = arith.constant 0.000000e+00 : f32
      %53 = vector.broadcast %cst_22 : f32 to vector<1x1xf32>
      %c0_23 = arith.constant 0 : index
      %c0_24 = arith.constant 0 : index
      %54 = vector.load %arg4[%c0_23, %c0_24] : memref<1x1xf32, #tpu.memory_space<vmem>>, vector<1x1xf32>
      tpu.vector_store %arg4[%c0_23, %c0_24], %53 {strides = array<i32>} : memref<1x1xf32, #tpu.memory_space<vmem>>, vector<1x1xf32>,
    } else {
    }
    %c0_15 = arith.constant 0 : index
    %c0_16 = arith.constant 0 : index
    %45 = vector.load %arg4[%c0_15, %c0_16] : memref<1x1xf32, #tpu.memory_space<vmem>>, vector<1x1xf32>
    %cst_17 = arith.constant dense<0.000000e+00> : vector<1xf32>
    %46 = vector.multi_reduction <add>, %41, %cst_17 [0] : vector<8x1xf32> to vector<1xf32>
    %47 = vector.shape_cast %46 : vector<1xf32> to vector<1x1xf32>
    %48 = arith.addf %45, %47 : vector<1x1xf32>
    %c0_18 = arith.constant 0 : index
    %c0_19 = arith.constant 0 : index
    %49 = vector.load %arg4[%c0_18, %c0_19] : memref<1x1xf32, #tpu.memory_space<vmem>>, vector<1x1xf32>
    tpu.vector_store %arg4[%c0_18, %c0_19], %48 {strides = array<i32>} : memref<1x1xf32, #tpu.memory_space<vmem>>, vector<1x1xf32>,
    %c0_i32_20 = arith.constant 0 : i32
    %50 = arith.cmpi eq, %arg0, %c0_i32_20 : i32
    %51 = arith.extui %50 : i1 to i32
    %c0_i32_21 = arith.constant 0 : i32
    %52 = arith.cmpi ne, %51, %c0_i32_21 : i32
    scf.if %52 {
      %c0_22 = arith.constant 0 : index
      %c0_23 = arith.constant 0 : index
      %53 = vector.load %arg4[%c0_22, %c0_23] : memref<1x1xf32, #tpu.memory_space<vmem>>, vector<1x1xf32>
      %cst_24 = arith.constant 1.250000e-01 : f32
      %54 = vector.broadcast %cst_24 : f32 to vector<1x1xf32>
      %55 = arith.mulf %53, %54 : vector<1x1xf32>
      %c0_25 = arith.constant 0 : index
      %c0_26 = arith.constant 0 : index
      %56 = vector.load %arg3[%c0_25, %c0_26] : memref<1x1xf32, #tpu.memory_space<vmem>>, vector<1x1xf32>
      tpu.vector_store %arg3[%c0_25, %c0_26], %55 {strides = array<i32>} : memref<1x1xf32, #tpu.memory_space<vmem>>, vector<1x1xf32>,
    } else {
    }
    return
  }
  func.func @transform_0(%arg0: i32) -> (i32, i32) {
    %c0_i32 = arith.constant 0 : i32
    %c0_i32_0 = arith.constant 0 : i32
    return %arg0, %c0_i32 : i32, i32
  }
  func.func @transform_1(%arg0: i32) -> (i32, i32) {
    %c0_i32 = arith.constant 0 : i32
    %c0_i32_0 = arith.constant 0 : i32
    return %arg0, %c0_i32 : i32, i32
  }
  func.func @transform_2(%arg0: i32) -> (i32, i32) {
    %c0_i32 = arith.constant 0 : i32
    %c0_i32_0 = arith.constant 0 : i32
    %c0_i32_1 = arith.constant 0 : i32
    return %c0_i32, %c0_i32_0 : i32, i32
  }
}

</mosaic_0001>

<llo_original>
// kernel: tpu_custom_call.1
$region0: #{tpu_custom_call.1}
  #allocation0 [shape = 'u32[]', space=smem, size = 0x4, offset = 0x4, fixed_abs, tag = 'smem constant byte address 0x4 - core index']
  #allocation1 [shape = 'u32[144,128]{1,0:T(1,128)}', space=vmem, size = 0x12000, scoped, tag = 'internal scratch']
  #allocation2 [shape = 'f32[1,1]{1,0:T(1,128)}', space=vmem, size = 0x200, scoped, tag = 'scratch operand']
  %s0 = inlined_call_operand.vmem [shape: f32[8,32], index: 0, kind: input, shape index: {}]
  %s1 = inlined_call_operand.vmem [shape: s32[8,1], index: 1, kind: input, shape index: {}]
  %s2 = inlined_call_operand.hbm [shape: f32[1,1], index: 2, kind: output, shape index: {}]
  %s3 = sld [smem:[#allocation0]]
  $region26: #{tpu_custom_call.1} parent=0
    _
  %s5 = ssub.s32 1, %s3
  %s6 = scalar_select 0, %s5, %s3
  $region1: #{tpu_custom_call.1} parent=0
    #allocation3 [shape = 'u8[512]{0}', space=vmem, size = 0x400, scoped, tag = 'output window, operand 0, single buffered']
    #allocation4 [shape = 's32[1]{0}', space=sflag, size = 0x4, scoped, tag = 'scoped memory for tpu_custom_call.1']
    %7 = vsyncpa [#allocation4], 0
    // Predicated region
    $region2: #{tpu_custom_call.1} parent=1 // pred_check
      _
    $region3: #{tpu_custom_call.1} parent=1 // pred_check_branch
      %9 = sbr.rel (0) target = $region5
    $region4: #{tpu_custom_call.1} parent=1 // pred_region
      _
    $region5: #{tpu_custom_call.1} parent=1 // pred_fallthru
      _
    // Predicated region
    $region6: #{tpu_custom_call.1} parent=1 // pred_check
      _
    $region7: #{tpu_custom_call.1} parent=1 // pred_check_branch
      %11 = sbr.rel (0) target = $region9
    $region8: #{tpu_custom_call.1} parent=1 // pred_region
      _
    $region9: #{tpu_custom_call.1} parent=1 // pred_fallthru
      _
    %v12 = vld [vmem:[%s0] sm:$0xff]
    %v13 = vld [vmem:[%s1] sm:$0xff]
    %vm14 = vcmp.ge.f32.partialorder %v12, 3.0
    %v15 = vsub.f32 %v12, 3.0
    %v16 = vadd.f32 %v15, 1.0
    %v17 = vmul.f32 %v16, 20.085537
    %v18 = vmul.f32 %v12, 1.442695
    %v19 = vpow.pop %v18
    %v20 = vsel %vm14, %v17, %v19
    %vm21 = vcmask 261120
    %v22 = vsel %vm21, %v20, 0.0
    %23 = vadd.xlane.f32.xlu0 %v22
    %v24 = vpop.xlane.xlu0 %23
    %v25 = vlaneseq
    %v26 = vand.u32 %v25, 127
    %27 = vset.pattern.permute.xlu0 0
    %28 = vperm.xlu0 %27, %v13
    %v29 = vpop.permute.xlu0 %28
    %vm30 = vcmp.eq.s32.totalorder %v26, %v29
    %v31 = vsel %vm30, 1, 0
    %v32 = vcvt.s32.f32 %v31
    %v33 = vmul.f32 %v12, %v32
    %v34 = vsel %vm21, %v33, 0.0
    %35 = vadd.xlane.f32.xlu0 %v34
    %v36 = vpop.xlane.xlu0 %35
    %vm37 = vcmp.ge.f32.partialorder %v36, 3.0
    %v38 = vsub.f32 %v36, 3.0
    %v39 = vadd.f32 %v38, 1.0
    %v40 = vlog2.pop %v39
    %v41 = vmul.f32 %v40, 0.6931472
    %v42 = vadd.f32 %v41, 3.0
    %v43 = vsel %vm37, %v42, %v36
    %v44 = vlog2.pop %v24
    %v45 = vmul.f32 %v44, 0.6931472
    %v46 = vsub.f32 %v45, %v43
    %v47 = vlaneseq
    %v48 = vshrl.u32 %v47, 7
    %s49 = smul.u32 0, 8
    %v50 = vstv %s49
    %v51 = vadd.s32 %v48, %v50
    %vm52 = vcmp.lt.s32.totalorder %v51, 8
    %v53 = vsel %vm52, %v46, 0.0
    %p54 = scmp.eq.s32.totalorder 0, 0
    // Predicated region
    $region10: #{tpu_custom_call.1} parent=1 // pred_check
      %p55 = pneg %p54
    $region11: #{tpu_custom_call.1} parent=1 // pred_check_branch
      %57 = sbr.rel (%p55) target = $region13
    $region12: #{tpu_custom_call.1} parent=1 // pred_region
      %vm58 = vcmask 0
      %59 = vst.msk [vmem:[#allocation2] sm:$0x1] %vm58, 0.0
    $region13: #{tpu_custom_call.1} parent=1 // pred_fallthru
      _
    %v60 = vld [vmem:[#allocation2] sm:$0x1]
    %v61 = vrot.slane %v53, 4
    %v62 = vadd.f32 %v53, %v61
    %v63 = vrot.slane %v62, 2
    %v64 = vadd.f32 %v62, %v63
    %v65 = vrot.slane %v64, 1
    %v66 = vadd.f32 %v64, %v65
    %v67 = vadd.f32 %v60, %v66
    %vm68 = vcmask 0
    %69 = vst.msk [vmem:[#allocation2] sm:$0x1] %vm68, %v67
    // Predicated region
    $region14: #{tpu_custom_call.1} parent=1 // pred_check
      %p70 = pneg %p54
    $region15: #{tpu_custom_call.1} parent=1 // pred_check_branch
      %72 = sbr.rel (%p70) target = $region17
    $region16: #{tpu_custom_call.1} parent=1 // pred_region
      %v73 = vld [vmem:[#allocation2] sm:$0x1]
      %v74 = vmul.f32 %v73, 0.125
      %75 = vst.msk [vmem:[#allocation3] sm:$0x1] %vm68, %v74
    $region17: #{tpu_custom_call.1} parent=1 // pred_fallthru
      _
    // Predicated region
    $region18: #{tpu_custom_call.1} parent=1 // pred_check
      _
    $region19: #{tpu_custom_call.1} parent=1 // pred_check_branch
      %77 = sbr.rel (0) target = $region21
    $region20: #{tpu_custom_call.1} parent=1 // pred_region
      %s79 = ssub.s32 16, 16
      %80 = vsyncadd [#allocation4], %s79
      %s82 = sshll.u32 [#allocation3], 4
      %s83 = int_to_ptr.vmem [resolvable:$true] %s82
      %85 = dma.vmem_to_hbm [thread:$0]  %s83, 16, %s2, [#allocation4]
    $region21: #{tpu_custom_call.1} parent=1 // pred_fallthru
      _
    // Predicated region
    $region22: #{tpu_custom_call.1} parent=1 // pred_check
      _
    $region23: #{tpu_custom_call.1} parent=1 // pred_check_branch
      %87 = sbr.rel (0) target = $region25
    $region24: #{tpu_custom_call.1} parent=1 // pred_region
      %88 = dma.done [#allocation4], 16
    $region25: #{tpu_custom_call.1} parent=1 // pred_fallthru
      _
    %89 = vsyncpa [#allocation4], 1

</llo_original>
